<compile_context>
chip_gen: v5e
topology: v5e:2x2
jax: 0.10.0
libtpu: 0.0.40
codegen_flags: <defaults>
</compile_context>

<pallas_src>
import functools

import jax
import jax.numpy as jnp
from jax import lax
from jax.experimental import pallas as pl
from jax.experimental.pallas import tpu as pltpu


def _group_norm_kernel(x_ref, w_ref, b_ref, o_ref, *, eps, inv_count, hw_valid):
    # x_ref:        (Nb, Gb, Cg, HWp)  activation block (lane-dense last axis)
    # w_ref, b_ref: (Gb, Cg, 1)        per-channel affine params, f32 (tiny)
    x = x_ref[...]
    xf = x.astype(jnp.float32)

    # Mean: reduce the long lane-major HW axis first (mostly VPU vreg adds,
    # one XLU lane-reduce per sublane group), then a tiny sublane reduce.
    s1 = jnp.sum(jnp.sum(xf, axis=3, keepdims=True), axis=2, keepdims=True)
    mean = s1 * inv_count                                  # (Nb, Gb, 1, 1)

    centered = xf - mean
    if hw_valid is not None:
        # Ragged tail: zero the padded lanes so they do not pollute the
        # variance (the mean sum is already correct since pads are zero).
        lane = lax.broadcasted_iota(jnp.int32, x.shape, 3)
        centered = jnp.where(lane < hw_valid, centered, 0.0)

    s2 = jnp.sum(jnp.sum(centered * centered, axis=3, keepdims=True),
                 axis=2, keepdims=True)
    var = s2 * inv_count
    inv = lax.rsqrt(var + eps)                             # (Nb, Gb, 1, 1)

    gamma = w_ref[...][None]                               # (1, Gb, Cg, 1)
    beta = b_ref[...][None]
    out = centered * (gamma * inv) + beta                  # fused affine
    o_ref[...] = out.astype(o_ref.dtype)


def _largest_divisor_leq(n, cap):
    cap = max(1, min(n, int(cap)))
    for d in range(cap, 0, -1):
        if n % d == 0:
            return d
    return 1


def _vmem_capacity_bytes():
    """Best-effort trace-time VMEM capacity query (defaults to the smallest,
    v7x's 64 MiB per-TensorCore, when detection is unavailable)."""
    try:
        info = pltpu.get_tpu_info()
        for attr in ("vmem_capacity_bytes", "vmem_size_bytes", "vmem_bytes"):
            cap = getattr(info, attr, None)
            if cap:
                return int(cap)
    except Exception:
        pass
    return 64 * 1024 * 1024


def _choose_blocks(n, g, group_bytes, target_bytes):
    rows_target = max(1, int(target_bytes) // max(int(group_bytes), 1))
    gb = _largest_divisor_leq(g, rows_target)
    nb = _largest_divisor_leq(n, max(1, rows_target // gb))

    def steps(nb_, gb_):
        return (n // nb_) * (g // gb_)

    # Prefer an even total number of grid steps (v7x shards parallel axes
    # across its 2 TensorCores); keep the largest block volume among them.
    if steps(nb, gb) % 2 != 0:
        best = None
        for nb_c in (d for d in range(nb, 0, -1) if n % d == 0):
            for gb_c in (d for d in range(gb, 0, -1) if g % d == 0):
                if steps(nb_c, gb_c) % 2 == 0:
                    vol = nb_c * gb_c
                    if best is None or vol > best[0]:
                        best = (vol, nb_c, gb_c)
        if best is not None:
            _, nb, gb = best
    return nb, gb


def group_norm_pallas(x, weight, bias, *, num_groups=32, min_channels_per_group=4,
                      eps=1e-5, target_block_bytes=None):
    """GroupNorm forward matching torch.nn.functional.group_norm on NCHW input."""
    n, c, h, w = x.shape
    g = min(num_groups, c // min_channels_per_group)
    g = max(g, 1)
    assert c % g == 0, "channels must be divisible by num_groups (torch semantics)"
    cg = c // g
    hw = h * w
    hwp = ((hw + 127) // 128) * 128
    needs_pad = hwp != hw

    # --- refold input: (N, C, H, W) -> (N, G, Cg, HWp), lane-dense last axis ---
    x4 = x.reshape(n, g, cg, hw)
    if needs_pad:
        # TODO(synk): this fallback pays one extra HBM copy for the pad/slice;
        # a fully ragged in-kernel gather path would avoid it.
        x4 = jnp.pad(x4, ((0, 0), (0, 0), (0, 0), (0, hwp - hw)))

    # --- per-channel affine params stay small: (G, Cg, 1) f32 ---
    w_gc = weight.astype(jnp.float32).reshape(g, cg, 1)
    b_gc = bias.astype(jnp.float32).reshape(g, cg, 1)

    # --- generation-aware block / VMEM sizing ---
    vmem_cap = _vmem_capacity_bytes()
    if vmem_cap >= 100 * 1024 * 1024:          # v5e / v6e (128 MiB physical)
        cap_limit = 96 * 1024 * 1024
        tgt = target_block_bytes or 6 * 1024 * 1024
    else:                                       # v7x (64 MiB per TensorCore)
        cap_limit = 40 * 1024 * 1024
        tgt = target_block_bytes or 3 * 1024 * 1024

    itemsize = x.dtype.itemsize
    group_bytes = cg * hwp * itemsize
    nb, gb = _choose_blocks(n, g, group_bytes, tgt)

    param_bytes = 2 * g * cg * 4

    def _need(nb_, gb_):
        elems = nb_ * gb_ * cg * hwp
        # double-buffered in + out, plus f32 temporaries (xf/centered/out)
        return 4 * elems * itemsize + 3 * elems * 4 + 4 * param_bytes

    # Shrink the block until it fits the generation's VMEM budget.
    while _need(nb, gb) > cap_limit and (nb > 1 or gb > 1):
        if nb > 1:
            nb = _largest_divisor_leq(n, nb - 1)
        else:
            gb = _largest_divisor_leq(g, gb - 1)
    # TODO(synk): a single (batch, group) whose Cg*H*W exceeds the VMEM budget
    # needs an HW-chunked two-pass variant (accumulate sum/sumsq, then normalize).

    vmem_limit = int(min(max(int(_need(nb, gb) * 1.25), 32 * 1024 * 1024), cap_limit))

    # Group axis outermost so the (tiny) param blocks stay resident across the
    # inner batch axis; both axes parallel for megacore / v7x 2-TC sharding.
    grid = (g // gb, n // nb)

    kernel = functools.partial(
        _group_norm_kernel,
        eps=float(eps),
        inv_count=1.0 / float(cg * hw),
        hw_valid=(hw if needs_pad else None),
    )

    out = pl.pallas_call(
        kernel,
        out_shape=jax.ShapeDtypeStruct((n, g, cg, hwp), x.dtype),
        grid_spec=pltpu.PrefetchScalarGridSpec(
            num_scalar_prefetch=0,
            grid=grid,
            in_specs=[
                pl.BlockSpec((nb, gb, cg, hwp), lambda gi, ni: (ni, gi, 0, 0)),
                pl.BlockSpec((gb, cg, 1), lambda gi, ni: (gi, 0, 0)),
                pl.BlockSpec((gb, cg, 1), lambda gi, ni: (gi, 0, 0)),
            ],
            out_specs=pl.BlockSpec((nb, gb, cg, hwp), lambda gi, ni: (ni, gi, 0, 0)),
        ),
        compiler_params=pltpu.CompilerParams(
            dimension_semantics=("parallel", "parallel"),
            vmem_limit_bytes=vmem_limit),
    )(x4, w_gc, b_gc)

    if needs_pad:
        out = out[..., :hw]
    return out.reshape(n, c, h, w)


def group_norm_ref(x, weight, bias, *, num_groups=32, min_channels_per_group=4,
                   eps=1e-5):
    """Pure-JAX reference (mirrors torch group_norm semantics)."""
    n, c, h, w = x.shape
    g = min(num_groups, c // min_channels_per_group)
    cg = c // g
    xr = x.reshape(n, g, cg * h * w).astype(jnp.float32)
    mean = xr.mean(axis=-1, keepdims=True)
    var = ((xr - mean) ** 2).mean(axis=-1, keepdims=True)
    xn = (xr - mean) * lax.rsqrt(var + eps)
    xn = xn.reshape(n, c, h, w)
    return (xn * weight.astype(jnp.float32).reshape(1, c, 1, 1)
            + bias.astype(jnp.float32).reshape(1, c, 1, 1)).astype(x.dtype)


if __name__ == "__main__":
    key = jax.random.PRNGKey(0)
    k_x, k_w, k_b = jax.random.split(key, 3)

    N, C, H, W = 2, 16, 16, 16   # num_groups = min(32, 16//4) = 4, Cg = 4, HW = 256

    x = jax.random.normal(k_x, (N, C, H, W), dtype=jnp.float32)
    # Non-trivial affine params (deterministic) to exercise the scale/shift path.
    weight = 1.0 + 0.1 * jax.random.normal(k_w, (C,), dtype=jnp.float32)
    bias = 0.1 * jax.random.normal(k_b, (C,), dtype=jnp.float32)

    y = group_norm_pallas(x, weight, bias)
    y = jax.block_until_ready(y)

    y_ref = group_norm_ref(x, weight, bias)
    assert y.shape == (N, C, H, W)
    assert jnp.max(jnp.abs(y - y_ref)) < 5e-4

    print("KERNEL_OK")
</pallas_src>

<mosaic_0001>
module attributes {stable_mosaic.version = 11 : i64} {
  func.func @_group_norm_kernel(%arg0: i32, %arg1: i32, %arg2: memref<2x2x4x256xf32, #tpu.memory_space<vmem>>, %arg3: memref<2x4x1xf32, #tpu.memory_space<vmem>>, %arg4: memref<2x4x1xf32, #tpu.memory_space<vmem>>, %arg5: memref<2x2x4x256xf32, #tpu.memory_space<vmem>>) attributes {dimension_semantics = [#tpu.dimension_semantics<parallel>, #tpu.dimension_semantics<parallel>], iteration_bounds = array<i64: 2, 1>, scalar_prefetch = 0 : i64, scratch_operands = 0 : i64, tpu.core_type = #tpu.core_type<tc>, window_params = [{transform_indices = @transform_0, window_bounds = array<i64: 2, 2, 4, 256>}, {transform_indices = @transform_1, window_bounds = array<i64: 2, 4, 1>}, {transform_indices = @transform_2, window_bounds = array<i64: 2, 4, 1>}, {transform_indices = @transform_3, window_bounds = array<i64: 2, 2, 4, 256>}]} {
    %c0 = arith.constant 0 : index
    %c0_0 = arith.constant 0 : index
    %c0_1 = arith.constant 0 : index
    %c0_2 = arith.constant 0 : index
    %0 = vector.load %arg2[%c0, %c0_0, %c0_1, %c0_2] : memref<2x2x4x256xf32, #tpu.memory_space<vmem>>, vector<2x2x4x256xf32>
    %cst = arith.constant dense<0.000000e+00> : vector<2x2x4xf32>
    %1 = vector.multi_reduction <add>, %0, %cst [3] : vector<2x2x4x256xf32> to vector<2x2x4xf32>
    %2 = vector.shape_cast %1 : vector<2x2x4xf32> to vector<2x2x4x1xf32>
    %cst_3 = arith.constant dense<0.000000e+00> : vector<2x2x1xf32>
    %3 = vector.multi_reduction <add>, %2, %cst_3 [2] : vector<2x2x4x1xf32> to vector<2x2x1xf32>
    %4 = vector.shape_cast %3 : vector<2x2x1xf32> to vector<2x2x1x1xf32>
    %cst_4 = arith.constant 9.765625E-4 : f32
    %5 = vector.broadcast %cst_4 : f32 to vector<2x2x1x1xf32>
    %6 = arith.mulf %4, %5 : vector<2x2x1x1xf32>
    %7 = vector.broadcast %6 : vector<2x2x1x1xf32> to vector<2x2x4x256xf32>
    %8 = arith.subf %0, %7 : vector<2x2x4x256xf32>
    %9 = arith.mulf %8, %8 : vector<2x2x4x256xf32>
    %cst_5 = arith.constant dense<0.000000e+00> : vector<2x2x4xf32>
    %10 = vector.multi_reduction <add>, %9, %cst_5 [3] : vector<2x2x4x256xf32> to vector<2x2x4xf32>
    %11 = vector.shape_cast %10 : vector<2x2x4xf32> to vector<2x2x4x1xf32>
    %cst_6 = arith.constant dense<0.000000e+00> : vector<2x2x1xf32>
    %12 = vector.multi_reduction <add>, %11, %cst_6 [2] : vector<2x2x4x1xf32> to vector<2x2x1xf32>
    %13 = vector.shape_cast %12 : vector<2x2x1xf32> to vector<2x2x1x1xf32>
    %cst_7 = arith.constant 9.765625E-4 : f32
    %14 = vector.broadcast %cst_7 : f32 to vector<2x2x1x1xf32>
    %15 = arith.mulf %13, %14 : vector<2x2x1x1xf32>
    %cst_8 = arith.constant 9.99999974E-6 : f32
    %16 = vector.broadcast %cst_8 : f32 to vector<2x2x1x1xf32>
    %17 = arith.addf %15, %16 : vector<2x2x1x1xf32>
    %18 = math.rsqrt %17 : vector<2x2x1x1xf32>
    %c0_9 = arith.constant 0 : index
    %c0_10 = arith.constant 0 : index
    %c0_11 = arith.constant 0 : index
    %19 = vector.load %arg3[%c0_9, %c0_10, %c0_11] : memref<2x4x1xf32, #tpu.memory_space<vmem>>, vector<2x4x1xf32>
    %20 = vector.shape_cast %19 : vector<2x4x1xf32> to vector<1x2x4x1xf32>
    %c0_12 = arith.constant 0 : index
    %c0_13 = arith.constant 0 : index
    %c0_14 = arith.constant 0 : index
    %21 = vector.load %arg4[%c0_12, %c0_13, %c0_14] : memref<2x4x1xf32, #tpu.memory_space<vmem>>, vector<2x4x1xf32>
    %22 = vector.shape_cast %21 : vector<2x4x1xf32> to vector<1x2x4x1xf32>
    %23 = vector.broadcast %20 : vector<1x2x4x1xf32> to vector<2x2x4x1xf32>
    %24 = vector.broadcast %18 : vector<2x2x1x1xf32> to vector<2x2x4x1xf32>
    %25 = arith.mulf %23, %24 : vector<2x2x4x1xf32>
    %26 = vector.broadcast %25 : vector<2x2x4x1xf32> to vector<2x2x4x256xf32>
    %27 = arith.mulf %8, %26 : vector<2x2x4x256xf32>
    %28 = vector.broadcast %22 : vector<1x2x4x1xf32> to vector<2x2x4x256xf32>
    %29 = arith.addf %27, %28 : vector<2x2x4x256xf32>
    %c0_15 = arith.constant 0 : index
    %c0_16 = arith.constant 0 : index
    %c0_17 = arith.constant 0 : index
    %c0_18 = arith.constant 0 : index
    %30 = vector.load %arg5[%c0_15, %c0_16, %c0_17, %c0_18] : memref<2x2x4x256xf32, #tpu.memory_space<vmem>>, vector<2x2x4x256xf32>
    tpu.vector_store %arg5[%c0_15, %c0_16, %c0_17, %c0_18], %29 {strides = array<i32>} : memref<2x2x4x256xf32, #tpu.memory_space<vmem>>, vector<2x2x4x256xf32>,
    return
  }
  func.func @transform_0(%arg0: i32, %arg1: i32) -> (i32, i32, i32, i32) {
    %c0_i32 = arith.constant 0 : i32
    %c0_i32_0 = arith.constant 0 : i32
    %c0_i32_1 = arith.constant 0 : i32
    return %arg1, %arg0, %c0_i32, %c0_i32_0 : i32, i32, i32, i32
  }
  func.func @transform_1(%arg0: i32, %arg1: i32) -> (i32, i32, i32) {
    %c0_i32 = arith.constant 0 : i32
    %c0_i32_0 = arith.constant 0 : i32
    %c0_i32_1 = arith.constant 0 : i32
    return %arg0, %c0_i32, %c0_i32_0 : i32, i32, i32
  }
  func.func @transform_2(%arg0: i32, %arg1: i32) -> (i32, i32, i32) {
    %c0_i32 = arith.constant 0 : i32
    %c0_i32_0 = arith.constant 0 : i32
    %c0_i32_1 = arith.constant 0 : i32
    return %arg0, %c0_i32, %c0_i32_0 : i32, i32, i32
  }
  func.func @transform_3(%arg0: i32, %arg1: i32) -> (i32, i32, i32, i32) {
    %c0_i32 = arith.constant 0 : i32
    %c0_i32_0 = arith.constant 0 : i32
    %c0_i32_1 = arith.constant 0 : i32
    return %arg1, %arg0, %c0_i32, %c0_i32_0 : i32, i32, i32, i32
  }
}

</mosaic_0001>

<llo_original>
// kernel: tpu_custom_call.1
$region0: #{tpu_custom_call.1}
  #allocation0 [shape = 'u32[]', space=smem, size = 0x4, offset = 0x4, fixed_abs, tag = 'smem constant byte address 0x4 - core index']
  #allocation1 [shape = 'u32[72,128]{1,0:T(1,128)}', space=vmem, size = 0x9000, scoped, tag = 'internal scratch']
  #allocation6 [shape = 's32[]', space=sflag, size = 0x4, offset = 0, fixed_abs, tag = 'sflag constant byte address 0x0 - dummy sync flag']
  #allocation8 [shape = 's32[]', space=sflag, size = 0x4, offset = 0, fixed_abs, tag = 'sflag constant byte address 0x0 - dummy sync flag']
  %s0 = inlined_call_operand.hbm [shape: f32[2,4,4,256], index: 0, kind: input, shape index: {}]
  %s1 = inlined_call_operand.vmem [shape: f32[4,4,1], index: 1, kind: input, shape index: {}]
  %s2 = inlined_call_operand.vmem [shape: f32[4,4,1], index: 2, kind: input, shape index: {}]
  %s3 = inlined_call_operand.hbm [shape: f32[2,4,4,256], index: 3, kind: output, shape index: {}]
  %s4 = sld [smem:[#allocation0]]
  $region49: #{tpu_custom_call.1} parent=0
    _
  %s6 = ssub.s32 1, %s4
  %s7 = scalar_select 0, %s6, %s4
  $region1: #{tpu_custom_call.1} parent=0
    #allocation2 [shape = 'u8[32768]{0}', space=vmem, size = 0x8000, scoped, tag = 'input window, operand 0']
    #allocation3 [shape = 's32[2]{0}', space=sflag, size = 0x8, scoped, tag = 'scoped memory for tpu_custom_call.1']
    #allocation4 [shape = 's32[2]{0}', space=sflag, size = 0x8, scoped, tag = 'scoped memory for tpu_custom_call.1']
    #allocation5 [shape = 'u8[32768]{0}', space=vmem, size = 0x8000, scoped, tag = 'output window, operand 0']
    %8 = vsyncpa [#allocation3], 0
    %s9 = scalar_lea.sflag [#allocation3], 1
    %10 = vsyncpa %s9, 0
    %11 = vsyncpa [#allocation4], 0
    %s12 = scalar_lea.sflag [#allocation4], 1
    %13 = vsyncpa %s12, 0
    loop: start=0, step=1, limit=4
    $region2: #{tpu_custom_call.1} parent=1 // loop_pre_header
      _
    $region3: #{tpu_custom_call.1} parent=1 // loop_header
      %s15 = sphi 0, %s19
      %p16 = scmp.ge.s32.totalorder %s15, 4
      %s22 = sphi 0, %s34
      %s23 = sphi 0, %s30
      %s24 = sphi 0, %s22
      %s25 = sphi 0, %s23
      %s26 = sphi 0, %s24
      %s27 = sphi 0, %s25
      %s39 = sphi 0, %s41
      %s42 = sphi 0, %s39
      %s43 = sphi 0, %s42
      %s59 = sphi 0, %s43
      %s65 = sphi 0, %s67
      %s68 = sphi 0, %s65
      %s69 = sphi 0, %s68
      %s85 = sphi 0, %s69
      %s91 = sphi 0, %s93
      %s94 = sphi 0, %s91
      %s95 = sphi 0, %s94
      %s111 = sphi 0, %s95
      %s119 = sphi 0, %s121
      %s122 = sphi 0, %s119
      %s123 = sphi 0, %s122
      %s139 = sphi 0, %s123
    $region4: #{tpu_custom_call.1} parent=1 // loop_header_branch
      %18 = sbr.rel (%p16) target = $region8
    $region5: #{tpu_custom_call.1} parent=1 // loop_body
      %s20 = ssub.s32 %s15, 1
      %s21 = ssub.s32 %s15, 2
      %s28 = sadd.s32 1, %s23
      %p29 = scmp.ge.s32.totalorder %s28, 1
      %s30 = scalar_select %p29, 0, %s28
      %s31 = sadd.s32 1, %s22
      %s32 = scalar_select %p29, %s31, %s22
      %p33 = scmp.ge.s32.totalorder %s32, 2
      %s34 = scalar_select %p33, 0, %s32
      %s35 = ssub.s32 %s23, %s30
      %s36 = ssub.s32 %s22, %s34
      %s37 = sor.u32 %s35, %s36
      %p38 = scmp.eq.s32.totalorder %s37, 0
      %s40 = sadd.s32 %s39, 1
      %s41 = scalar_select %p38, %s39, %s40
      %p44 = pneg %p38
      %p45 = scmp.eq.s32.totalorder %s15, 1
      %p46 = por %p44, %p45
      %p47 = scmp.ne.s32.totalorder %s39, %s42
      %p48 = scmp.eq.s32.totalorder %s15, 0
      %p49 = por %p47, %p48
      %p50 = scmp.ne.s32.totalorder %s39, %s42
      %p51 = scmp.eq.s32.totalorder %s20, 1
      %p52 = por %p50, %p51
      %p53 = scmp.ne.s32.totalorder %s42, %s43
      %p54 = scmp.eq.s32.totalorder %s20, 0
      %p55 = por %p53, %p54
      %p56 = scmp.ne.s32.totalorder %s42, %s43
      %p57 = scmp.eq.s32.totalorder %s21, 1
      %p58 = por %p56, %p57
      %p60 = scmp.ne.s32.totalorder %s43, %s59
      %p61 = scmp.eq.s32.totalorder %s21, 0
      %p62 = por %p60, %p61
      %s63 = ssub.s32 %s22, %s34
      %p64 = scmp.eq.s32.totalorder %s63, 0
      %s66 = sadd.s32 %s65, 1
      %s67 = scalar_select %p64, %s65, %s66
      %p70 = pneg %p64
      %p71 = scmp.eq.s32.totalorder %s15, 1
      %p72 = por %p70, %p71
      %p73 = scmp.ne.s32.totalorder %s65, %s68
      %p74 = scmp.eq.s32.totalorder %s15, 0
      %p75 = por %p73, %p74
      %p76 = scmp.ne.s32.totalorder %s65, %s68
      %p77 = scmp.eq.s32.totalorder %s20, 1
      %p78 = por %p76, %p77
      %p79 = scmp.ne.s32.totalorder %s68, %s69
      %p80 = scmp.eq.s32.totalorder %s20, 0
      %p81 = por %p79, %p80
      %p82 = scmp.ne.s32.totalorder %s68, %s69
      %p83 = scmp.eq.s32.totalorder %s21, 1
      %p84 = por %p82, %p83
      %p86 = scmp.ne.s32.totalorder %s69, %s85
      %p87 = scmp.eq.s32.totalorder %s21, 0
      %p88 = por %p86, %p87
      %s89 = ssub.s32 %s22, %s34
      %p90 = scmp.eq.s32.totalorder %s89, 0
      %s92 = sadd.s32 %s91, 1
      %s93 = scalar_select %p90, %s91, %s92
      %p96 = pneg %p90
      %p97 = scmp.eq.s32.totalorder %s15, 1
      %p98 = por %p96, %p97
      %p99 = scmp.ne.s32.totalorder %s91, %s94
      %p100 = scmp.eq.s32.totalorder %s15, 0
      %p101 = por %p99, %p100
      %p102 = scmp.ne.s32.totalorder %s91, %s94
      %p103 = scmp.eq.s32.totalorder %s20, 1
      %p104 = por %p102, %p103
      %p105 = scmp.ne.s32.totalorder %s94, %s95
      %p106 = scmp.eq.s32.totalorder %s20, 0
      %p107 = por %p105, %p106
      %p108 = scmp.ne.s32.totalorder %s94, %s95
      %p109 = scmp.eq.s32.totalorder %s21, 1
      %p110 = por %p108, %p109
      %p112 = scmp.ne.s32.totalorder %s95, %s111
      %p113 = scmp.eq.s32.totalorder %s21, 0
      %p114 = por %p112, %p113
      %s115 = ssub.s32 %s23, %s30
      %s116 = ssub.s32 %s22, %s34
      %s117 = sor.u32 %s115, %s116
      %p118 = scmp.eq.s32.totalorder %s117, 0
      %s120 = sadd.s32 %s119, 1
      %s121 = scalar_select %p118, %s119, %s120
      %p124 = pneg %p118
      %p125 = scmp.eq.s32.totalorder %s15, 1
      %p126 = por %p124, %p125
      %p127 = scmp.ne.s32.totalorder %s119, %s122
      %p128 = scmp.eq.s32.totalorder %s15, 0
      %p129 = por %p127, %p128
      %p130 = scmp.ne.s32.totalorder %s119, %s122
      %p131 = scmp.eq.s32.totalorder %s20, 1
      %p132 = por %p130, %p131
      %p133 = scmp.ne.s32.totalorder %s122, %s123
      %p134 = scmp.eq.s32.totalorder %s20, 0
      %p135 = por %p133, %p134
      %p136 = scmp.ne.s32.totalorder %s122, %s123
      %p137 = scmp.eq.s32.totalorder %s21, 1
      %p138 = por %p136, %p137
      %p140 = scmp.ne.s32.totalorder %s123, %s139
      %p141 = scmp.eq.s32.totalorder %s21, 0
      %p142 = por %p140, %p141
      %p143 = scmp.le.s32.totalorder 1, %s15
      %p144 = scmp.lt.s32.totalorder %s15, 3
      %p145 = pnand %p143, %p144
      %p146 = pneg %p145
      // Predicated region
      $region9: #{tpu_custom_call.1} parent=5 // pred_check
        _
      $region10: #{tpu_custom_call.1} parent=5 // pred_check_branch
        %148 = sbr.rel (%p145) target = $region12
      $region11: #{tpu_custom_call.1} parent=5 // pred_region
        %s149 = ssub.s32 %s15, 1
      $region12: #{tpu_custom_call.1} parent=5 // pred_fallthru
        _
      %p150 = scmp.lt.s32.totalorder %s15, 2
      // Predicated region
      $region13: #{tpu_custom_call.1} parent=5 // pred_check
        %p151 = pneg %p150
      $region14: #{tpu_custom_call.1} parent=5 // pred_check_branch
        %153 = sbr.rel (%p151) target = $region16
      $region15: #{tpu_custom_call.1} parent=5 // pred_region
        // Predicated region
        $region17: #{tpu_custom_call.1} parent=15 // pred_check
          %p154 = pneg %p49
        $region18: #{tpu_custom_call.1} parent=15 // pred_check_branch
          %156 = sbr.rel (%p154) target = $region20
        $region19: #{tpu_custom_call.1} parent=15 // pred_region
          #allocation7 [shape = 'u32[6]{0}', space=smem, size = 0x18, scoped, tag = 'DMA stride descriptor']
          %s157 = sand.u32 %s39, 1
          %s158 = scalar_lea.sflag [#allocation3], %s157
          %s159 = sand.u32 %s39, 1
          %s160 = smul.addr %s159, 32
          %s161 = scalar_lea.vmem [#allocation2], %s160
          %s162 = smul.u32 2, %s23
          %s163 = smul.u32 2, %s22
          %165 = vsyncadd %s158, 0
          %s166 = smul.addr %s163, 2
          %s167 = smul.addr %s162, 8
          %s168 = sadd.s32 %s166, %s167
          %s169 = smul.addr %s168, 4
          %s170 = scalar_lea.hbm %s0, %s169
          %s172 = sshll.u32 1, 14
          %s173 = sxor.u32 4294967295, %s172
          %s175 = sld [smem:[#allocation0]]
          %s176 = sadd.s32 2, %s175
          %s178 = sshll.u32 7, 26
          %s179 = sxor.u32 4294967295, %s178
          %s180 = sand.u32 0, %s179
          %s181 = sshll.u32 %s176, 26
          %s182 = sor.u32 %s180, %s181
          %s183 = sshll.u32 %s170, 4
          %s184 = int_to_ptr.hbm [resolvable:$true] %s183
          %s185 = sshll.u32 %s161, 4
          %s186 = int_to_ptr.vmem [resolvable:$true] %s185
          %192 = sst [smem:[#allocation7]] 512
          %s193 = scalar_lea.smem [#allocation7], 1
          %194 = sst [smem:[%s193]] 256
          %s195 = scalar_lea.smem [#allocation7], 2
          %196 = sst [smem:[%s195]] 2
          %s197 = scalar_lea.smem [#allocation7], 3
          %198 = sst [smem:[%s197]] 128
          %s199 = scalar_lea.smem [#allocation7], 4
          %200 = sst [smem:[%s199]] 128
          %s201 = scalar_lea.smem [#allocation7], 5
          %202 = sst [smem:[%s201]] 8
          %204 = dma.general %s184, 512, %s186, %s158, [#allocation6], [#allocation7], %s182, 0
        $region20: #{tpu_custom_call.1} parent=15 // pred_fallthru
          _
        // Predicated region
        $region21: #{tpu_custom_call.1} parent=15 // pred_check
          %p205 = pneg %p75
        $region22: #{tpu_custom_call.1} parent=15 // pred_check_branch
          %207 = sbr.rel (%p205) target = $region24
        $region23: #{tpu_custom_call.1} parent=15 // pred_region
          %s208 = smul.u32 2, %s22
          %p209 = scmp.lt.s32.totalorder %s208, 3
          %s210 = scalar_select %p209, %s208, 3
          %s211 = smul.addr %s210, 4
          %s212 = scalar_lea.vmem %s1, %s211
          %s213 = smul.u32 2, %s22
        $region24: #{tpu_custom_call.1} parent=15 // pred_fallthru
          _
        // Predicated region
        $region25: #{tpu_custom_call.1} parent=15 // pred_check
          %p214 = pneg %p101
        $region26: #{tpu_custom_call.1} parent=15 // pred_check_branch
          %216 = sbr.rel (%p214) target = $region28
        $region27: #{tpu_custom_call.1} parent=15 // pred_region
          %s217 = smul.u32 2, %s22
          %p218 = scmp.lt.s32.totalorder %s217, 3
          %s219 = scalar_select %p218, %s217, 3
          %s220 = smul.addr %s219, 4
          %s221 = scalar_lea.vmem %s2, %s220
          %s222 = smul.u32 2, %s22
        $region28: #{tpu_custom_call.1} parent=15 // pred_fallthru
          _
      $region16: #{tpu_custom_call.1} parent=5 // pred_fallthru
        _
      %p223 = scmp.le.s32.totalorder 1, %s15
      %p224 = scmp.lt.s32.totalorder %s15, 3
      %p225 = pnand %p223, %p224
      %p226 = pneg %p225
      // Predicated region
      $region29: #{tpu_custom_call.1} parent=5 // pred_check
        _
      $region30: #{tpu_custom_call.1} parent=5 // pred_check_branch
        %228 = sbr.rel (%p225) target = $region32
      $region31: #{tpu_custom_call.1} parent=5 // pred_region
        %s229 = ssub.s32 %s15, 1
        %s230 = sand.u32 %s42, 1
        %s231 = scalar_lea.sflag [#allocation3], %s230
        %s232 = sand.u32 %s42, 1
        %s233 = smul.addr %s232, 32
        %s234 = scalar_lea.vmem [#allocation2], %s233
        // Predicated region
        $region33: #{tpu_custom_call.1} parent=31 // pred_check
          %p235 = pneg %p55
        $region34: #{tpu_custom_call.1} parent=31 // pred_check_branch
          %237 = sbr.rel (%p235) target = $region36
        $region35: #{tpu_custom_call.1} parent=31 // pred_region
          %239 = dma.done %s231, 512
        $region36: #{tpu_custom_call.1} parent=31 // pred_fallthru
          _
        %s240 = sand.u32 %s42, 1
        %s241 = scalar_lea.sflag [#allocation3], %s240
        %s242 = sand.u32 %s42, 1
        %s243 = smul.addr %s242, 32
        %s244 = scalar_lea.vmem [#allocation2], %s243
        %p245 = pneg %p55
        %p246 = pneg %p52
        %s247 = smul.u32 2, %s24
        %p248 = scmp.lt.s32.totalorder %s247, 3
        %s249 = scalar_select %p248, %s247, 3
        %s250 = smul.addr %s249, 4
        %s251 = scalar_lea.vmem %s1, %s250
        %p252 = pneg %p81
        %p253 = pneg %p78
        %s254 = smul.u32 2, %s24
        %p255 = scmp.lt.s32.totalorder %s254, 3
        %s256 = scalar_select %p255, %s254, 3
        %s257 = smul.addr %s256, 4
        %s258 = scalar_lea.vmem %s2, %s257
        %p259 = pneg %p107
        %p260 = pneg %p104
        %p261 = pneg %p135
        %p262 = pneg %p132
        %s263 = sand.u32 %s122, 1
        %s264 = scalar_lea.sflag [#allocation4], %s263
        %s265 = sand.u32 %s122, 1
        %s266 = smul.addr %s265, 32
        %s267 = scalar_lea.vmem [#allocation5], %s266
        %s268 = smul.u32 2, %s25
        %s269 = smul.u32 2, %s24
        %s270 = smul.u32 2, %s24
        %p271 = scmp.lt.s32.totalorder %s270, 3
        %s272 = scalar_select %p271, %s270, 3
        %s273 = smul.addr %s272, 4
        %s274 = scalar_lea.vmem %s1, %s273
        %s275 = smul.u32 2, %s24
        %s276 = smul.u32 2, %s24
        %p277 = scmp.lt.s32.totalorder %s276, 3
        %s278 = scalar_select %p277, %s276, 3
        %s279 = smul.addr %s278, 4
        %s280 = scalar_lea.vmem %s2, %s279
        %s281 = smul.u32 2, %s24
        %s282 = smul.u32 2, %s25
        %s283 = smul.u32 2, %s24
        %v284 = vld [vmem:[%s234] sm:$0xff]
        %v285 = vld [vmem:[%s234 + $0x8] sm:$0xff]
        %v286 = vld [vmem:[%s234 + $0x10] sm:$0xff]
        %v287 = vld [vmem:[%s234 + $0x18] sm:$0xff]
        %292 = vst [vmem:[#allocation1] ss:$2 sm:$0xff] %v284
        %v293 = vld.sshfl [vmem:[#allocation1] sm:$0xff pattern:$0x75316420]
        %v294 = vld.sshfl [vmem:[#allocation1 + $0x8] sm:$0xff pattern:$0x75316420]
        %s295 = scalar_lea.vmem [#allocation1], 16
        %296 = vst [vmem:[%s295] ss:$2 sm:$0xff] %v285
        %v297 = vld.sshfl [vmem:[#allocation1 + $0x10] sm:$0xff pattern:$0x75316420]
        %v298 = vld.sshfl [vmem:[#allocation1 + $0x18] sm:$0xff pattern:$0x75316420]
        %s299 = scalar_lea.vmem [#allocation1], 32
        %300 = vst [vmem:[%s299] ss:$2 sm:$0xff] %v286
        %v301 = vld.sshfl [vmem:[#allocation1 + $0x20] sm:$0xff pattern:$0x75316420]
        %v302 = vld.sshfl [vmem:[#allocation1 + $0x28] sm:$0xff pattern:$0x75316420]
        %s303 = scalar_lea.vmem [#allocation1], 48
        %304 = vst [vmem:[%s303] ss:$2 sm:$0xff] %v287
        %v305 = vld.sshfl [vmem:[#allocation1 + $0x30] sm:$0xff pattern:$0x75316420]
        %v306 = vld.sshfl [vmem:[#allocation1 + $0x38] sm:$0xff pattern:$0x75316420]
        %vm315 = vcmask 1043456
        %v316 = vsel %vm315, %v293, 0.0
        %v317 = vsel %vm315, %v294, 0.0
        %v318 = vadd.f32 %v316, %v317
        %319 = vadd.xlane.f32.xlu0 %v318
        %v320 = vpop.xlane.xlu0 %319
        %v321 = vsel %vm315, %v297, 0.0
        %v322 = vsel %vm315, %v298, 0.0
        %v323 = vadd.f32 %v321, %v322
        %324 = vadd.xlane.f32.xlu0 %v323
        %v325 = vpop.xlane.xlu0 %324
        %v326 = vsel %vm315, %v301, 0.0
        %v327 = vsel %vm315, %v302, 0.0
        %v328 = vadd.f32 %v326, %v327
        %329 = vadd.xlane.f32.xlu0 %v328
        %v330 = vpop.xlane.xlu0 %329
        %v331 = vsel %vm315, %v305, 0.0
        %v332 = vsel %vm315, %v306, 0.0
        %v333 = vadd.f32 %v331, %v332
        %334 = vadd.xlane.f32.xlu0 %v333
        %v335 = vpop.xlane.xlu0 %334
        %v336 = vsel %vm315, %v320, 0.0
        %v337 = vrot.slane %v336, 4
        %v338 = vadd.f32 %v336, %v337
        %v339 = vrot.slane %v338, 2
        %v340 = vadd.f32 %v338, %v339
        %v341 = vrot.slane %v340, 1
        %v342 = vadd.f32 %v340, %v341
        %v343 = vsel %vm315, %v325, 0.0
        %v344 = vrot.slane %v343, 4
        %v345 = vadd.f32 %v343, %v344
        %v346 = vrot.slane %v345, 2
        %v347 = vadd.f32 %v345, %v346
        %v348 = vrot.slane %v347, 1
        %v349 = vadd.f32 %v347, %v348
        %v350 = vsel %vm315, %v330, 0.0
        %v351 = vrot.slane %v350, 4
        %v352 = vadd.f32 %v350, %v351
        %v353 = vrot.slane %v352, 2
        %v354 = vadd.f32 %v352, %v353
        %v355 = vrot.slane %v354, 1
        %v356 = vadd.f32 %v354, %v355
        %v357 = vsel %vm315, %v335, 0.0
        %v358 = vrot.slane %v357, 4
        %v359 = vadd.f32 %v357, %v358
        %v360 = vrot.slane %v359, 2
        %v361 = vadd.f32 %v359, %v360
        %v362 = vrot.slane %v361, 1
        %v363 = vadd.f32 %v361, %v362
        %v364 = vmul.f32 %v342, 0.0009765625
        %v365 = vmul.f32 %v349, 0.0009765625
        %v366 = vmul.f32 %v356, 0.0009765625
        %v367 = vmul.f32 %v363, 0.0009765625
        %v368 = vsub.f32 %v284, %v364
        %v369 = vsub.f32 %v285, %v365
        %v370 = vsub.f32 %v286, %v366
        %v371 = vsub.f32 %v287, %v367
        %v372 = vmul.f32 %v368, %v368
        %v373 = vmul.f32 %v369, %v369
        %v374 = vmul.f32 %v370, %v370
        %v375 = vmul.f32 %v371, %v371
        %380 = vst [vmem:[#allocation1] ss:$2 sm:$0xff] %v372
        %v381 = vld.sshfl [vmem:[#allocation1] sm:$0xff pattern:$0x75316420]
        %v382 = vld.sshfl [vmem:[#allocation1 + $0x8] sm:$0xff pattern:$0x75316420]
        %s383 = scalar_lea.vmem [#allocation1], 16
        %384 = vst [vmem:[%s383] ss:$2 sm:$0xff] %v373
        %v385 = vld.sshfl [vmem:[#allocation1 + $0x10] sm:$0xff pattern:$0x75316420]
        %v386 = vld.sshfl [vmem:[#allocation1 + $0x18] sm:$0xff pattern:$0x75316420]
        %s387 = scalar_lea.vmem [#allocation1], 32
        %388 = vst [vmem:[%s387] ss:$2 sm:$0xff] %v374
        %v389 = vld.sshfl [vmem:[#allocation1 + $0x20] sm:$0xff pattern:$0x75316420]
        %v390 = vld.sshfl [vmem:[#allocation1 + $0x28] sm:$0xff pattern:$0x75316420]
        %s391 = scalar_lea.vmem [#allocation1], 48
        %392 = vst [vmem:[%s391] ss:$2 sm:$0xff] %v375
        %v393 = vld.sshfl [vmem:[#allocation1 + $0x30] sm:$0xff pattern:$0x75316420]
        %v394 = vld.sshfl [vmem:[#allocation1 + $0x38] sm:$0xff pattern:$0x75316420]
        %v403 = vsel %vm315, %v381, 0.0
        %v404 = vsel %vm315, %v382, 0.0
        %v405 = vadd.f32 %v403, %v404
        %406 = vadd.xlane.f32.xlu0 %v405
        %v407 = vpop.xlane.xlu0 %406
        %v408 = vsel %vm315, %v385, 0.0
        %v409 = vsel %vm315, %v386, 0.0
        %v410 = vadd.f32 %v408, %v409
        %411 = vadd.xlane.f32.xlu0 %v410
        %v412 = vpop.xlane.xlu0 %411
        %v413 = vsel %vm315, %v389, 0.0
        %v414 = vsel %vm315, %v390, 0.0
        %v415 = vadd.f32 %v413, %v414
        %416 = vadd.xlane.f32.xlu0 %v415
        %v417 = vpop.xlane.xlu0 %416
        %v418 = vsel %vm315, %v393, 0.0
        %v419 = vsel %vm315, %v394, 0.0
        %v420 = vadd.f32 %v418, %v419
        %421 = vadd.xlane.f32.xlu0 %v420
        %v422 = vpop.xlane.xlu0 %421
        %v423 = vsel %vm315, %v407, 0.0
        %v424 = vrot.slane %v423, 4
        %v425 = vadd.f32 %v423, %v424
        %v426 = vrot.slane %v425, 2
        %v427 = vadd.f32 %v425, %v426
        %v428 = vrot.slane %v427, 1
        %v429 = vadd.f32 %v427, %v428
        %v430 = vsel %vm315, %v412, 0.0
        %v431 = vrot.slane %v430, 4
        %v432 = vadd.f32 %v430, %v431
        %v433 = vrot.slane %v432, 2
        %v434 = vadd.f32 %v432, %v433
        %v435 = vrot.slane %v434, 1
        %v436 = vadd.f32 %v434, %v435
        %v437 = vsel %vm315, %v417, 0.0
        %v438 = vrot.slane %v437, 4
        %v439 = vadd.f32 %v437, %v438
        %v440 = vrot.slane %v439, 2
        %v441 = vadd.f32 %v439, %v440
        %v442 = vrot.slane %v441, 1
        %v443 = vadd.f32 %v441, %v442
        %v444 = vsel %vm315, %v422, 0.0
        %v445 = vrot.slane %v444, 4
        %v446 = vadd.f32 %v444, %v445
        %v447 = vrot.slane %v446, 2
        %v448 = vadd.f32 %v446, %v447
        %v449 = vrot.slane %v448, 1
        %v450 = vadd.f32 %v448, %v449
        %v451 = vmul.f32 %v429, 0.0009765625
        %v452 = vmul.f32 %v436, 0.0009765625
        %v453 = vmul.f32 %v443, 0.0009765625
        %v454 = vmul.f32 %v450, 0.0009765625
        %v455 = vadd.f32 %v451, 1e-05
        %v456 = vadd.f32 %v452, 1e-05
        %v457 = vadd.f32 %v453, 1e-05
        %v458 = vadd.f32 %v454, 1e-05
        %v459 = vrsqrt.pop %v455
        %v460 = vmul.f32 %v459, %v455
        %v461 = vmul.f32 %v460, %v459
        %v462 = vmul.f32 0.5, %v461
        %v463 = vsub.f32 1.5, %v462
        %v464 = vmul.f32 %v459, %v463
        %vm465 = vweird.f32 %v455
        %vm466 = vweird.f32 %v459
        %vm467 = vmor %vm465, %vm466
        %v468 = vsel %vm467, %v459, %v464
        %v469 = vrsqrt.pop %v456
        %v470 = vmul.f32 %v469, %v456
        %v471 = vmul.f32 %v470, %v469
        %v472 = vmul.f32 0.5, %v471
        %v473 = vsub.f32 1.5, %v472
        %v474 = vmul.f32 %v469, %v473
        %vm475 = vweird.f32 %v456
        %vm476 = vweird.f32 %v469
        %vm477 = vmor %vm475, %vm476
        %v478 = vsel %vm477, %v469, %v474
        %v479 = vrsqrt.pop %v457
        %v480 = vmul.f32 %v479, %v457
        %v481 = vmul.f32 %v480, %v479
        %v482 = vmul.f32 0.5, %v481
        %v483 = vsub.f32 1.5, %v482
        %v484 = vmul.f32 %v479, %v483
        %vm485 = vweird.f32 %v457
        %vm486 = vweird.f32 %v479
        %vm487 = vmor %vm485, %vm486
        %v488 = vsel %vm487, %v479, %v484
        %v489 = vrsqrt.pop %v458
        %v490 = vmul.f32 %v489, %v458
        %v491 = vmul.f32 %v490, %v489
        %v492 = vmul.f32 0.5, %v491
        %v493 = vsub.f32 1.5, %v492
        %v494 = vmul.f32 %v489, %v493
        %vm495 = vweird.f32 %v458
        %vm496 = vweird.f32 %v489
        %vm497 = vmor %vm495, %vm496
        %v498 = vsel %vm497, %v489, %v494
        %v499 = vld [vmem:[%s274] sm:$0xf]
        %v500 = vld [vmem:[%s274 + $0x4] sm:$0xf]
        %v501 = vld [vmem:[%s280] sm:$0xf]
        %v502 = vld [vmem:[%s280 + $0x4] sm:$0xf]
        %v503 = vmul.f32 %v499, %v468
        %v504 = vmul.f32 %v500, %v478
        %v505 = vmul.f32 %v499, %v488
        %v506 = vmul.f32 %v500, %v498
        %508 = vset.pattern.permute.xlu0 0
        %509 = vperm.xlu0 %508, %v503
        %v510 = vpop.permute.xlu0 %509
        %512 = vset.pattern.permute.xlu0 0
        %513 = vperm.xlu0 %512, %v504
        %v514 = vpop.permute.xlu0 %513
        %516 = vset.pattern.permute.xlu0 0
        %517 = vperm.xlu0 %516, %v505
        %v518 = vpop.permute.xlu0 %517
        %520 = vset.pattern.permute.xlu0 0
        %521 = vperm.xlu0 %520, %v506
        %v522 = vpop.permute.xlu0 %521
        %v524 = vunpack.c.l.s4 839922192
        %v525 = vunpack.c.0.s8 %v524
        %v526 = vperm.slane %v510, %v525
        %v528 = vunpack.c.l.s4 839922192
        %v529 = vunpack.c.0.s8 %v528
        %v530 = vperm.slane %v514, %v529
        %v532 = vunpack.c.l.s4 839922192
        %v533 = vunpack.c.0.s8 %v532
        %v534 = vperm.slane %v518, %v533
        %v536 = vunpack.c.l.s4 839922192
        %v537 = vunpack.c.0.s8 %v536
        %v538 = vperm.slane %v522, %v537
        %v543 = vmul.f32 %v368, %v526
        %v544 = vmul.f32 %v369, %v530
        %v545 = vmul.f32 %v370, %v534
        %v546 = vmul.f32 %v371, %v538
        %548 = vset.pattern.permute.xlu0 0
        %549 = vperm.xlu0 %548, %v501
        %v550 = vpop.permute.xlu0 %549
        %552 = vset.pattern.permute.xlu0 0
        %553 = vperm.xlu0 %552, %v502
        %v554 = vpop.permute.xlu0 %553
        %v556 = vunpack.c.l.s4 839922192
        %v557 = vunpack.c.0.s8 %v556
        %v558 = vperm.slane %v550, %v557
        %v560 = vunpack.c.l.s4 839922192
        %v561 = vunpack.c.0.s8 %v560
        %v562 = vperm.slane %v554, %v561
        %v565 = vadd.f32 %v543, %v558
        %v566 = vadd.f32 %v544, %v562
        %v567 = vadd.f32 %v545, %v558
        %v568 = vadd.f32 %v546, %v562
        %569 = vst [vmem:[%s267] sm:$0xff] %v565
        %570 = vst [vmem:[%s267 + $0x8] sm:$0xff] %v566
        %571 = vst [vmem:[%s267 + $0x10] sm:$0xff] %v567
        %572 = vst [vmem:[%s267 + $0x18] sm:$0xff] %v568
        %s573 = sand.u32 %s122, 1
        %s574 = scalar_lea.sflag [#allocation4], %s573
        %s575 = sand.u32 %s122, 1
        %s576 = smul.addr %s575, 32
        %s577 = scalar_lea.vmem [#allocation5], %s576
        // Predicated region
        $region37: #{tpu_custom_call.1} parent=31 // pred_check
          %p578 = pneg %p132
        $region38: #{tpu_custom_call.1} parent=31 // pred_check_branch
          %580 = sbr.rel (%p578) target = $region40
        $region39: #{tpu_custom_call.1} parent=31 // pred_region
          #allocation9 [shape = 'u32[6]{0}', space=smem, size = 0x18, scoped, tag = 'DMA stride descriptor']
          %s581 = smul.u32 2, %s25
          %s582 = smul.u32 2, %s24
          %584 = vsyncadd %s574, 0
          %s585 = smul.addr %s582, 2
          %s586 = smul.addr %s581, 8
          %s587 = sadd.s32 %s585, %s586
          %s588 = smul.addr %s587, 4
          %s589 = scalar_lea.hbm %s3, %s588
          %s591 = sshll.u32 1, 14
          %s592 = sxor.u32 4294967295, %s591
          %s595 = sshll.u32 7, 18
          %s596 = sxor.u32 4294967295, %s595
          %s597 = sand.u32 0, %s596
          %s599 = sor.u32 %s597, 0
          %s600 = sshll.u32 %s577, 4
          %s601 = int_to_ptr.vmem [resolvable:$true] %s600
          %s602 = sshll.u32 %s589, 4
          %s603 = int_to_ptr.hbm [resolvable:$true] %s602
          %609 = sst [smem:[#allocation9]] 256
          %s610 = scalar_lea.smem [#allocation9], 1
          %611 = sst [smem:[%s610]] 512
          %s612 = scalar_lea.smem [#allocation9], 2
          %613 = sst [smem:[%s612]] 2
          %s614 = scalar_lea.smem [#allocation9], 3
          %615 = sst [smem:[%s614]] 128
          %s616 = scalar_lea.smem [#allocation9], 4
          %617 = sst [smem:[%s616]] 128
          %s618 = scalar_lea.smem [#allocation9], 5
          %619 = sst [smem:[%s618]] 8
          %621 = dma.general %s601, 512, %s603, %s574, [#allocation8], [#allocation9], %s599, 0
        $region40: #{tpu_custom_call.1} parent=31 // pred_fallthru
          _
      $region32: #{tpu_custom_call.1} parent=5 // pred_fallthru
        _
      %p622 = scmp.le.s32.totalorder 2, %s15
      // Predicated region
      $region41: #{tpu_custom_call.1} parent=5 // pred_check
        %p623 = pneg %p622
      $region42: #{tpu_custom_call.1} parent=5 // pred_check_branch
        %625 = sbr.rel (%p623) target = $region44
      $region43: #{tpu_custom_call.1} parent=5 // pred_region
        %s626 = ssub.s32 %s15, 2
        // Predicated region
        $region45: #{tpu_custom_call.1} parent=43 // pred_check
          %p627 = pneg %p138
        $region46: #{tpu_custom_call.1} parent=43 // pred_check_branch
          %629 = sbr.rel (%p627) target = $region48
        $region47: #{tpu_custom_call.1} parent=43 // pred_region
          %s630 = sand.u32 %s123, 1
          %s631 = scalar_lea.sflag [#allocation4], %s630
          %s632 = sand.u32 %s123, 1
          %s633 = smul.addr %s632, 32
          %s634 = scalar_lea.vmem [#allocation5], %s633
          %636 = dma.done %s631, 512
        $region48: #{tpu_custom_call.1} parent=43 // pred_fallthru
          _
      $region44: #{tpu_custom_call.1} parent=5 // pred_fallthru
        _
    $region6: #{tpu_custom_call.1} parent=1 // loop_footer
      %s19 = sadd.s32 1, %s15
    $region7: #{tpu_custom_call.1} parent=1 // loop_footer_branch
      %14 = sbr.rel target = $region3
    $region8: #{tpu_custom_call.1} parent=1 // loop_exit
      _
    %637 = vsyncpa [#allocation3], 1
    %s638 = scalar_lea.sflag [#allocation3], 1
    %639 = vsyncpa %s638, 1
    %640 = vsyncpa [#allocation4], 1
    %s641 = scalar_lea.sflag [#allocation4], 1
    %642 = vsyncpa %s641, 1

</llo_original>
